<compile_context>
chip_gen: v5e
topology: v5e:2x2
jax: 0.10.0
libtpu: 0.0.40
codegen_flags: <defaults>
</compile_context>

<pallas_src>
import jax
import jax.numpy as jnp
from jax.experimental import pallas as pl
from jax.experimental.pallas import tpu as pltpu

NEG_BIG = -1e30  # bias for padded vocab columns -> exp() underflows to 0


def _round_up(x, m):
    return (x + m - 1) // m * m


def _device_kind():
    try:
        return jax.devices()[0].device_kind.lower()
    except Exception:
        return ""


def _pick_tile_v(w_out_rows):
    """Vocab tile sized so one W_out tile is >= ~0.6 us of HBM DMA."""
    kind = _device_kind()
    if "v7" in kind:
        target_bytes = 2 * 1024 * 1024      # ~0.7 us @ ~3.2 TB/s per TC
    elif "v6" in kind:
        target_bytes = 1 * 1024 * 1024      # ~0.7 us @ ~1.4 TB/s
    else:
        target_bytes = 512 * 1024           # v5e / unknown: ~0.6 us @ ~0.8 TB/s
    tile_v = max(target_bytes // (w_out_rows * 2), 512)   # bf16 = 2 bytes
    return min(_round_up(tile_v, 128), 32768)


def _vmem_limit_bytes():
    # v7x has only 64 MiB physical VMEM per TC; v5e/v6e have 128 MiB.
    return (48 if "v7" in _device_kind() else 96) * 1024 * 1024


def _decoder_step_kernel(xh_ref, wrnn_ref, brnn_ref, wout_ref, bout_ref,
                         logp_ref, hout_ref,
                         h_scratch, m_scratch, s_scratch):
    j = pl.program_id(0)
    nj = pl.num_programs(0)
    tile_v = wout_ref.shape[1]

    @pl.when(j == 0)
    def _rnn_cell():
        # Fused RNN cell: h_new = tanh([x, h] @ [W_ih; W_hh] + (b_ih + b_hh)).
        # bf16 operands, f32 accumulation, f32 tanh/state.
        pre = (jnp.dot(xh_ref[...], wrnn_ref[...],
                       preferred_element_type=jnp.float32)
               + brnn_ref[...])
        h_new = jnp.tanh(pre)
        hout_ref[...] = h_new
        # Only the first Hr_pad (<=16-padded) columns feed the output matmul.
        h_scratch[...] = h_new[:, :h_scratch.shape[1]].astype(h_scratch.dtype)
        m_scratch[...] = jnp.full(m_scratch.shape, -jnp.inf, m_scratch.dtype)
        s_scratch[...] = jnp.zeros(s_scratch.shape, s_scratch.dtype)

    # Logits for this vocab tile: bf16 x bf16 MXU matmul, f32 accumulation,
    # bias streamed alongside W_out and added on the VPU.
    logits = (jnp.dot(h_scratch[...], wout_ref[...],
                      preferred_element_type=jnp.float32)
              + bout_ref[...])

    # Stage unnormalized logits directly into the resident logp block.
    col = pl.multiple_of(j * tile_v, tile_v)
    logp_ref[:, pl.ds(col, tile_v)] = logits

    # Online log-softmax statistics.
    m_prev = m_scratch[...]
    m_new = jnp.maximum(m_prev, jnp.max(logits, axis=-1, keepdims=True))
    s_scratch[...] = (s_scratch[...] * jnp.exp(m_prev - m_new)
                      + jnp.sum(jnp.exp(logits - m_new), axis=-1,
                                keepdims=True))
    m_scratch[...] = m_new

    @pl.when(j == nj - 1)
    def _normalize():
        lse = m_scratch[...] + jnp.log(s_scratch[...])
        logp_ref[...] = logp_ref[...] - lse


def decoder_step(input_ids, hidden, params):
    """input_ids: (B, 1) int32 tokens; hidden: (1, B, H) float32.
    Returns (logp (B, V) float32, hidden (1, B, H) float32)."""
    emb_table, w_rnn, b_rnn, w_out, b_out, dims = params
    E, H, V, tile_v = dims
    B = input_ids.shape[0]
    K_pad, Hcol_pad = w_rnn.shape
    Hr_pad, V_pad = w_out.shape
    assert V_pad % tile_v == 0
    nj = V_pad // tile_v

    # Embedding lookup (dropout == identity in eval) and [x, h] packing.
    embs = jnp.take(emb_table, input_ids[:, 0], axis=0).astype(jnp.float32)
    h_prev = hidden[0].astype(jnp.float32)                      # (B, H)
    pad = jnp.zeros((B, K_pad - E - H), jnp.float32)
    xh = jnp.concatenate([embs, h_prev, pad], axis=1).astype(jnp.bfloat16)

    # W_out (and its bias) stream one vocab tile per grid step; everything
    # else stays resident (constant index maps).
    if nj >= 3:
        wout_spec = pl.BlockSpec((Hr_pad, tile_v), lambda j: (0, j),
                                 pipeline_mode=pl.Buffered(3))
    else:
        wout_spec = pl.BlockSpec((Hr_pad, tile_v), lambda j: (0, j))

    bytes_in = (xh.size * 2 + w_rnn.size * 2 + b_rnn.size * 4
                + w_out.size * 2 + b_out.size * 4)
    bytes_out = B * V_pad * 4 + B * Hcol_pad * 4
    cost = pl.CostEstimate(
        flops=2 * B * K_pad * Hcol_pad + 2 * B * Hr_pad * V_pad,
        transcendentals=B * (Hcol_pad + V_pad),
        bytes_accessed=bytes_in + bytes_out)

    logp_pad, h_pad = pl.pallas_call(
        _decoder_step_kernel,
        out_shape=(jax.ShapeDtypeStruct((B, V_pad), jnp.float32),
                   jax.ShapeDtypeStruct((B, Hcol_pad), jnp.float32)),
        grid_spec=pltpu.PrefetchScalarGridSpec(
            num_scalar_prefetch=0,
            grid=(nj,),
            in_specs=[
                pl.BlockSpec((B, K_pad), lambda j: (0, 0)),          # xh (bf16)
                pl.BlockSpec((K_pad, Hcol_pad), lambda j: (0, 0)),   # W_rnn (bf16)
                pl.BlockSpec((1, Hcol_pad), lambda j: (0, 0)),       # b_rnn (f32)
                wout_spec,                                           # W_out (bf16)
                pl.BlockSpec((1, tile_v), lambda j: (0, j)),         # b_out (f32)
            ],
            out_specs=(
                pl.BlockSpec((B, V_pad), lambda j: (0, 0)),          # logp (resident)
                pl.BlockSpec((B, Hcol_pad), lambda j: (0, 0)),       # h_new
            ),
            scratch_shapes=[
                pltpu.VMEM((B, Hr_pad), jnp.bfloat16),   # h (matmul operand)
                pltpu.VMEM((B, 1), jnp.float32),         # running max
                pltpu.VMEM((B, 1), jnp.float32),         # running sum
            ],
        ),
        compiler_params=pltpu.CompilerParams(
            dimension_semantics=("arbitrary",),
            vmem_limit_bytes=_vmem_limit_bytes()),
        cost_estimate=cost,
    )(xh, w_rnn, b_rnn, w_out, b_out)

    return logp_pad[:, :V], h_pad[None, :, :H]


def make_params(key, emb_size, decoder_hidden_size, output_size, *, tile_v=None):
    """Builds padded/fused kernel params and the raw f32 params for reference."""
    E, H, V = emb_size, decoder_hidden_size, output_size
    K_pad = _round_up(E + H, 128)        # lane dim of xh / sublane dim of W_rnn
    Hcol_pad = _round_up(H, 128)         # lane padding where H is the last dim
    Hr_pad = _round_up(H, 16)            # bf16 sublane padding for W_out rows
    if tile_v is None:
        tile_v = _pick_tile_v(Hr_pad)
    tile_v = _round_up(min(tile_v, _round_up(V, 128)), 128)
    V_pad = _round_up(V, tile_v)

    ks = jax.random.split(key, 7)
    scale = 1.0 / (H ** 0.5)
    emb_table = jax.random.normal(ks[0], (V, E), jnp.float32)
    w_ih = jax.random.uniform(ks[1], (E, H), jnp.float32, -scale, scale)
    w_hh = jax.random.uniform(ks[2], (H, H), jnp.float32, -scale, scale)
    b_ih = jax.random.uniform(ks[3], (H,), jnp.float32, -scale, scale)
    b_hh = jax.random.uniform(ks[4], (H,), jnp.float32, -scale, scale)
    w_lin = jax.random.uniform(ks[5], (H, V), jnp.float32, -scale, scale)
    b_lin = jax.random.uniform(ks[6], (V,), jnp.float32, -scale, scale)

    # Fused + padded RNN weight [W_ih ; W_hh] -> (K_pad, Hcol_pad), bf16.
    w_rnn = jnp.zeros((K_pad, Hcol_pad), jnp.float32)
    w_rnn = w_rnn.at[:E, :H].set(w_ih)
    w_rnn = w_rnn.at[E:E + H, :H].set(w_hh)
    w_rnn = w_rnn.astype(jnp.bfloat16)

    # Fused RNN bias (f32).
    b_rnn = jnp.zeros((1, Hcol_pad), jnp.float32).at[0, :H].set(b_ih + b_hh)

    # Output projection, rows padded only to the bf16 sublane multiple (16).
    w_out = jnp.zeros((Hr_pad, V_pad), jnp.float32).at[:H, :V].set(w_lin)
    w_out = w_out.astype(jnp.bfloat16)

    # Streamed output bias; padded vocab columns -> -1e30 (ignored by softmax).
    b_out = jnp.full((1, V_pad), NEG_BIG, jnp.float32).at[0, :V].set(b_lin)

    kernel_params = (emb_table, w_rnn, b_rnn, w_out, b_out, (E, H, V, tile_v))
    raw_params = (emb_table, w_ih, w_hh, b_ih, b_hh, w_lin, b_lin)
    return kernel_params, raw_params


def decoder_ref(input_ids, hidden, raw_params):
    emb_table, w_ih, w_hh, b_ih, b_hh, w_lin, b_lin = raw_params
    embs = jnp.take(emb_table, input_ids[:, 0], axis=0)
    h_prev = hidden[0]
    h_new = jnp.tanh(embs @ w_ih + h_prev @ w_hh + b_ih + b_hh)
    logits = h_new @ w_lin + b_lin
    logp = jax.nn.log_softmax(logits, axis=-1)
    return logp, h_new[None, :, :]


if __name__ == "__main__":
    B = 2
    emb_size = 32
    encoder_hidden_size = 32   # unused by the forward; kept for module parity
    decoder_hidden_size = 32
    output_size = 64

    key = jax.random.PRNGKey(0)
    kp, ki, kh = jax.random.split(key, 3)

    kernel_params, raw_params = make_params(
        kp, emb_size, decoder_hidden_size, output_size)
    input_ids = jax.random.randint(ki, (B, 1), 0, output_size, dtype=jnp.int32)
    hidden = jax.random.normal(kh, (1, B, decoder_hidden_size), jnp.float32)

    out, h_new = decoder_step(input_ids, hidden, kernel_params)
    jax.block_until_ready((out, h_new))

    ref_out, ref_h = decoder_ref(input_ids, hidden, raw_params)
    assert out.shape == (B, output_size)
    assert h_new.shape == (1, B, decoder_hidden_size)
    # RNN cell uses bf16 operands (f32 accumulation / f32 tanh) -> bf16 tol.
    assert jnp.allclose(h_new, ref_h, atol=1e-2, rtol=1e-2), \
        float(jnp.max(jnp.abs(h_new - ref_h)))
    # Logits use bf16 h / bf16 W_out (f32 accumulation) -> bf16-level tol.
    assert jnp.allclose(out, ref_out, atol=5e-2, rtol=1e-2), \
        float(jnp.max(jnp.abs(out - ref_out)))

    print("KERNEL_OK")
</pallas_src>

<mosaic_0001>
module attributes {stable_mosaic.version = 11 : i64} {
  func.func @_decoder_step_kernel(%arg0: i32, %arg1: memref<2x128xbf16, #tpu.memory_space<vmem>>, %arg2: memref<128x128xbf16, #tpu.memory_space<vmem>>, %arg3: memref<1x128xf32, #tpu.memory_space<vmem>>, %arg4: memref<32x128xbf16, #tpu.memory_space<vmem>>, %arg5: memref<1x128xf32, #tpu.memory_space<vmem>>, %arg6: memref<2x128xf32, #tpu.memory_space<vmem>>, %arg7: memref<2x128xf32, #tpu.memory_space<vmem>>, %arg8: memref<2x32xbf16, #tpu.memory_space<vmem>>, %arg9: memref<2x1xf32, #tpu.memory_space<vmem>>, %arg10: memref<2x1xf32, #tpu.memory_space<vmem>>) attributes {dimension_semantics = [#tpu.dimension_semantics<arbitrary>], iteration_bounds = array<i64: 1>, scalar_prefetch = 0 : i64, scratch_operands = 3 : i64, tpu.core_type = #tpu.core_type<tc>, window_params = [{pipeline_mode = #tpu.pipeline_mode<synchronous>, transform_indices = @transform_0, window_bounds = array<i64: 2, 128>}, {pipeline_mode = #tpu.pipeline_mode<synchronous>, transform_indices = @transform_1, window_bounds = array<i64: 128, 128>}, {pipeline_mode = #tpu.pipeline_mode<synchronous>, transform_indices = @transform_2, window_bounds = array<i64: 1, 128>}, {transform_indices = @transform_3, window_bounds = array<i64: 32, 128>}, {transform_indices = @transform_4, window_bounds = array<i64: 1, 128>}, {pipeline_mode = #tpu.pipeline_mode<synchronous>, transform_indices = @transform_5, window_bounds = array<i64: 2, 128>}, {pipeline_mode = #tpu.pipeline_mode<synchronous>, transform_indices = @transform_6, window_bounds = array<i64: 2, 128>}]} {
    %c0_i32 = arith.constant 0 : i32
    %0 = arith.cmpi eq, %arg0, %c0_i32 : i32
    %1 = arith.extui %0 : i1 to i32
    %c0_i32_0 = arith.constant 0 : i32
    %2 = arith.cmpi ne, %1, %c0_i32_0 : i32
    scf.if %2 {
      %c0_19 = arith.constant 0 : index
      %c0_20 = arith.constant 0 : index
      %32 = vector.load %arg1[%c0_19, %c0_20] : memref<2x128xbf16, #tpu.memory_space<vmem>>, vector<2x128xbf16>
      %c0_21 = arith.constant 0 : index
      %c0_22 = arith.constant 0 : index
      %33 = vector.load %arg2[%c0_21, %c0_22] : memref<128x128xbf16, #tpu.memory_space<vmem>>, vector<128x128xbf16>
      %cst_23 = arith.constant dense<0.000000e+00> : vector<2x128xf32>
      %34 = tpu.matmul %32, %33, %cst_23 {dimension_numbers = #tpu.dot_dimension_numbers<[1], [0], [0], [1], [0, 0, 1, 1], [], []>} : vector<2x128xbf16>, vector<128x128xbf16>, vector<2x128xf32> -> vector<2x128xf32>
      %c0_24 = arith.constant 0 : index
      %c0_25 = arith.constant 0 : index
      %35 = vector.load %arg3[%c0_24, %c0_25] : memref<1x128xf32, #tpu.memory_space<vmem>>, vector<1x128xf32>
      %36 = vector.broadcast %35 : vector<1x128xf32> to vector<2x128xf32>
      %37 = arith.addf %34, %36 : vector<2x128xf32>
      %38 = math.tanh %37 : vector<2x128xf32>
      %c0_26 = arith.constant 0 : index
      %c0_27 = arith.constant 0 : index
      %39 = vector.load %arg7[%c0_26, %c0_27] : memref<2x128xf32, #tpu.memory_space<vmem>>, vector<2x128xf32>
      tpu.vector_store %arg7[%c0_26, %c0_27], %38 {strides = array<i32>} : memref<2x128xf32, #tpu.memory_space<vmem>>, vector<2x128xf32>,
      %40 = vector.extract_strided_slice %38 {offsets = [0, 0], sizes = [2, 32], strides = [1, 1]} : vector<2x128xf32> to vector<2x32xf32>
      %41 = arith.truncf %40 : vector<2x32xf32> to vector<2x32xbf16>
      %c0_28 = arith.constant 0 : index
      %c0_29 = arith.constant 0 : index
      %42 = vector.load %arg8[%c0_28, %c0_29] : memref<2x32xbf16, #tpu.memory_space<vmem>>, vector<2x32xbf16>
      tpu.vector_store %arg8[%c0_28, %c0_29], %41 {strides = array<i32>} : memref<2x32xbf16, #tpu.memory_space<vmem>>, vector<2x32xbf16>,
      %cst_30 = arith.constant 0xFF800000 : f32
      %43 = vector.broadcast %cst_30 : f32 to vector<2x1xf32>
      %c0_31 = arith.constant 0 : index
      %c0_32 = arith.constant 0 : index
      %44 = vector.load %arg9[%c0_31, %c0_32] : memref<2x1xf32, #tpu.memory_space<vmem>>, vector<2x1xf32>
      tpu.vector_store %arg9[%c0_31, %c0_32], %43 {strides = array<i32>} : memref<2x1xf32, #tpu.memory_space<vmem>>, vector<2x1xf32>,
      %cst_33 = arith.constant 0.000000e+00 : f32
      %45 = vector.broadcast %cst_33 : f32 to vector<2x1xf32>
      %c0_34 = arith.constant 0 : index
      %c0_35 = arith.constant 0 : index
      %46 = vector.load %arg10[%c0_34, %c0_35] : memref<2x1xf32, #tpu.memory_space<vmem>>, vector<2x1xf32>
      tpu.vector_store %arg10[%c0_34, %c0_35], %45 {strides = array<i32>} : memref<2x1xf32, #tpu.memory_space<vmem>>, vector<2x1xf32>,
    } else {
    }
    %c0 = arith.constant 0 : index
    %c0_1 = arith.constant 0 : index
    %3 = vector.load %arg8[%c0, %c0_1] : memref<2x32xbf16, #tpu.memory_space<vmem>>, vector<2x32xbf16>
    %c0_2 = arith.constant 0 : index
    %c0_3 = arith.constant 0 : index
    %4 = vector.load %arg4[%c0_2, %c0_3] : memref<32x128xbf16, #tpu.memory_space<vmem>>, vector<32x128xbf16>
    %cst = arith.constant dense<0.000000e+00> : vector<2x128xf32>
    %5 = tpu.matmul %3, %4, %cst {dimension_numbers = #tpu.dot_dimension_numbers<[1], [0], [0], [1], [0, 0, 1, 1], [], []>} : vector<2x32xbf16>, vector<32x128xbf16>, vector<2x128xf32> -> vector<2x128xf32>
    %c0_4 = arith.constant 0 : index
    %c0_5 = arith.constant 0 : index
    %6 = vector.load %arg5[%c0_4, %c0_5] : memref<1x128xf32, #tpu.memory_space<vmem>>, vector<1x128xf32>
    %7 = vector.broadcast %6 : vector<1x128xf32> to vector<2x128xf32>
    %8 = arith.addf %5, %7 : vector<2x128xf32>
    %c128_i32 = arith.constant 128 : i32
    %9 = arith.muli %arg0, %c128_i32 : i32
    %10 = tpu.assume_multiple %9, 128 : i32
    %c0_6 = arith.constant 0 : index
    %11 = arith.index_cast %10 : i32 to index
    %12 = vector.load %arg6[%c0_6, %11] : memref<2x128xf32, #tpu.memory_space<vmem>>, vector<2x128xf32>
    tpu.vector_store %arg6[%c0_6, %11], %8 {strides = array<i32>} : memref<2x128xf32, #tpu.memory_space<vmem>>, vector<2x128xf32>,
    %c0_7 = arith.constant 0 : index
    %c0_8 = arith.constant 0 : index
    %13 = vector.load %arg9[%c0_7, %c0_8] : memref<2x1xf32, #tpu.memory_space<vmem>>, vector<2x1xf32>
    %cst_9 = arith.constant dense<0xFF800000> : vector<2xf32>
    %14 = vector.multi_reduction <maximumf>, %8, %cst_9 [1] : vector<2x128xf32> to vector<2xf32>
    %15 = vector.shape_cast %14 : vector<2xf32> to vector<2x1xf32>
    %16 = arith.maximumf %13, %15 : vector<2x1xf32>
    %c0_10 = arith.constant 0 : index
    %c0_11 = arith.constant 0 : index
    %17 = vector.load %arg10[%c0_10, %c0_11] : memref<2x1xf32, #tpu.memory_space<vmem>>, vector<2x1xf32>
    %18 = arith.subf %13, %16 : vector<2x1xf32>
    %19 = math.exp %18 : vector<2x1xf32>
    %20 = arith.mulf %17, %19 : vector<2x1xf32>
    %21 = vector.broadcast %16 : vector<2x1xf32> to vector<2x128xf32>
    %22 = arith.subf %8, %21 : vector<2x128xf32>
    %23 = math.exp %22 : vector<2x128xf32>
    %cst_12 = arith.constant dense<0.000000e+00> : vector<2xf32>
    %24 = vector.multi_reduction <add>, %23, %cst_12 [1] : vector<2x128xf32> to vector<2xf32>
    %25 = vector.shape_cast %24 : vector<2xf32> to vector<2x1xf32>
    %26 = arith.addf %20, %25 : vector<2x1xf32>
    %c0_13 = arith.constant 0 : index
    %c0_14 = arith.constant 0 : index
    %27 = vector.load %arg10[%c0_13, %c0_14] : memref<2x1xf32, #tpu.memory_space<vmem>>, vector<2x1xf32>
    tpu.vector_store %arg10[%c0_13, %c0_14], %26 {strides = array<i32>} : memref<2x1xf32, #tpu.memory_space<vmem>>, vector<2x1xf32>,
    %c0_15 = arith.constant 0 : index
    %c0_16 = arith.constant 0 : index
    %28 = vector.load %arg9[%c0_15, %c0_16] : memref<2x1xf32, #tpu.memory_space<vmem>>, vector<2x1xf32>
    tpu.vector_store %arg9[%c0_15, %c0_16], %16 {strides = array<i32>} : memref<2x1xf32, #tpu.memory_space<vmem>>, vector<2x1xf32>,
    %c0_i32_17 = arith.constant 0 : i32
    %29 = arith.cmpi eq, %arg0, %c0_i32_17 : i32
    %30 = arith.extui %29 : i1 to i32
    %c0_i32_18 = arith.constant 0 : i32
    %31 = arith.cmpi ne, %30, %c0_i32_18 : i32
    scf.if %31 {
      %c0_19 = arith.constant 0 : index
      %c0_20 = arith.constant 0 : index
      %32 = vector.load %arg9[%c0_19, %c0_20] : memref<2x1xf32, #tpu.memory_space<vmem>>, vector<2x1xf32>
      %c0_21 = arith.constant 0 : index
      %c0_22 = arith.constant 0 : index
      %33 = vector.load %arg10[%c0_21, %c0_22] : memref<2x1xf32, #tpu.memory_space<vmem>>, vector<2x1xf32>
      %34 = math.log %33 : vector<2x1xf32>
      %35 = arith.addf %32, %34 : vector<2x1xf32>
      %c0_23 = arith.constant 0 : index
      %c0_24 = arith.constant 0 : index
      %36 = vector.load %arg6[%c0_23, %c0_24] : memref<2x128xf32, #tpu.memory_space<vmem>>, vector<2x128xf32>
      %37 = vector.broadcast %35 : vector<2x1xf32> to vector<2x128xf32>
      %38 = arith.subf %36, %37 : vector<2x128xf32>
      %c0_25 = arith.constant 0 : index
      %c0_26 = arith.constant 0 : index
      %39 = vector.load %arg6[%c0_25, %c0_26] : memref<2x128xf32, #tpu.memory_space<vmem>>, vector<2x128xf32>
      tpu.vector_store %arg6[%c0_25, %c0_26], %38 {strides = array<i32>} : memref<2x128xf32, #tpu.memory_space<vmem>>, vector<2x128xf32>,
    } else {
    }
    return
  }
  func.func @transform_0(%arg0: i32) -> (i32, i32) {
    %c0_i32 = arith.constant 0 : i32
    %c0_i32_0 = arith.constant 0 : i32
    %c0_i32_1 = arith.constant 0 : i32
    return %c0_i32, %c0_i32_0 : i32, i32
  }
  func.func @transform_1(%arg0: i32) -> (i32, i32) {
    %c0_i32 = arith.constant 0 : i32
    %c0_i32_0 = arith.constant 0 : i32
    %c0_i32_1 = arith.constant 0 : i32
    return %c0_i32, %c0_i32_0 : i32, i32
  }
  func.func @transform_2(%arg0: i32) -> (i32, i32) {
    %c0_i32 = arith.constant 0 : i32
    %c0_i32_0 = arith.constant 0 : i32
    %c0_i32_1 = arith.constant 0 : i32
    return %c0_i32, %c0_i32_0 : i32, i32
  }
  func.func @transform_3(%arg0: i32) -> (i32, i32) {
    %c0_i32 = arith.constant 0 : i32
    %c0_i32_0 = arith.constant 0 : i32
    return %c0_i32, %arg0 : i32, i32
  }
  func.func @transform_4(%arg0: i32) -> (i32, i32) {
    %c0_i32 = arith.constant 0 : i32
    %c0_i32_0 = arith.constant 0 : i32
    return %c0_i32, %arg0 : i32, i32
  }
  func.func @transform_5(%arg0: i32) -> (i32, i32) {
    %c0_i32 = arith.constant 0 : i32
    %c0_i32_0 = arith.constant 0 : i32
    %c0_i32_1 = arith.constant 0 : i32
    return %c0_i32, %c0_i32_0 : i32, i32
  }
  func.func @transform_6(%arg0: i32) -> (i32, i32) {
    %c0_i32 = arith.constant 0 : i32
    %c0_i32_0 = arith.constant 0 : i32
    %c0_i32_1 = arith.constant 0 : i32
    return %c0_i32, %c0_i32_0 : i32, i32
  }
}

</mosaic_0001>

<llo_original>
// kernel: tpu_custom_call.1
$region0: #{tpu_custom_call.1}
  #allocation0 [shape = 'u32[]', space=smem, size = 0x4, offset = 0x4, fixed_abs, tag = 'smem constant byte address 0x4 - core index']
  #allocation1 [shape = 'u32[72,128]{1,0:T(1,128)}', space=vmem, size = 0x9000, scoped, tag = 'internal scratch']
  #allocation2 [shape = 'bf16[2,32]{1,0:T(2,128)(2,1)}', space=vmem, size = 0x200, scoped, tag = 'scratch operand']
  #allocation3 [shape = 'f32[2,1]{1,0:T(2,128)}', space=vmem, size = 0x400, scoped, tag = 'scratch operand']
  #allocation4 [shape = 'f32[2,1]{1,0:T(2,128)}', space=vmem, size = 0x400, scoped, tag = 'scratch operand']
  %s0 = inlined_call_operand.hbm [shape: bf16[2,128], index: 0, kind: input, shape index: {}]
  %s1 = inlined_call_operand.hbm [shape: bf16[128,128], index: 1, kind: input, shape index: {}]
  %s2 = inlined_call_operand.vmem [shape: f32[1,128], index: 2, kind: input, shape index: {}]
  %s3 = inlined_call_operand.hbm [shape: bf16[32,128], index: 3, kind: input, shape index: {}]
  %s4 = inlined_call_operand.vmem [shape: f32[1,128], index: 4, kind: input, shape index: {}]
  %s5 = inlined_call_operand.hbm [shape: f32[2,128], index: 5, kind: output, shape index: {0}]
  %s6 = inlined_call_operand.hbm [shape: f32[2,128], index: 6, kind: output, shape index: {1}]
  %7 = xla_tuple %s5, %s6
  %s8 = sld [smem:[#allocation0]]
  $region58: #{tpu_custom_call.1} parent=0
    _
  %s10 = ssub.s32 1, %s8
  %s11 = scalar_select 0, %s10, %s8
  $region1: #{tpu_custom_call.1} parent=0
    #allocation5 [shape = 'u8[512]{0}', space=vmem, size = 0x400, scoped, tag = 'input window, operand 0, single buffered']
    #allocation6 [shape = 's32[1]{0}', space=sflag, size = 0x4, scoped, tag = 'scoped memory for tpu_custom_call.1']
    #allocation7 [shape = 's32[1]{0}', space=sflag, size = 0x4, scoped, tag = 'scoped memory for tpu_custom_call.1']
    #allocation8 [shape = 'u8[32768]{0}', space=vmem, size = 0x8000, scoped, tag = 'input window, operand 1, single buffered']
    #allocation9 [shape = 's32[1]{0}', space=sflag, size = 0x4, scoped, tag = 'scoped memory for tpu_custom_call.1']
    #allocation10 [shape = 'u8[8192]{0}', space=vmem, size = 0x2000, scoped, tag = 'input window, operand 3, single buffered']
    #allocation11 [shape = 'u8[1024]{0}', space=vmem, size = 0x400, scoped, tag = 'output window, operand 0, single buffered']
    #allocation12 [shape = 'u8[1024]{0}', space=vmem, size = 0x400, scoped, tag = 'output window, operand 1, single buffered']
    #allocation13 [shape = 's32[1]{0}', space=sflag, size = 0x4, scoped, tag = 'scoped memory for tpu_custom_call.1']
    %12 = vsyncpa [#allocation6], 0
    %13 = vsyncpa [#allocation9], 0
    %14 = vsyncpa [#allocation7], 0
    %15 = vsyncpa [#allocation13], 0
    // Predicated region
    $region2: #{tpu_custom_call.1} parent=1 // pred_check
      _
    $region3: #{tpu_custom_call.1} parent=1 // pred_check_branch
      %17 = sbr.rel (0) target = $region5
    $region4: #{tpu_custom_call.1} parent=1 // pred_region
      %19 = vsyncadd [#allocation6], 0
      %s21 = sshll.u32 %s0, 4
      %s22 = int_to_ptr.hbm [resolvable:$true] %s21
      %s23 = sshll.u32 [#allocation5], 4
      %s24 = int_to_ptr.vmem [resolvable:$true] %s23
      %26 = dma.hbm_to_vmem [thread:$0]  %s22, 16, %s24, [#allocation6]
    $region5: #{tpu_custom_call.1} parent=1 // pred_fallthru
      _
    // Predicated region
    $region6: #{tpu_custom_call.1} parent=1 // pred_check
      _
    $region7: #{tpu_custom_call.1} parent=1 // pred_check_branch
      %28 = sbr.rel (0) target = $region9
    $region8: #{tpu_custom_call.1} parent=1 // pred_region
      %30 = vsyncadd [#allocation9], 0
      %s31 = sshll.u32 %s1, 4
      %s32 = int_to_ptr.hbm [resolvable:$true] %s31
      %s33 = sshll.u32 [#allocation8], 4
      %s34 = int_to_ptr.vmem [resolvable:$true] %s33
      %39 = dma.hbm_to_vmem [thread:$0]  %s32, 1024, %s34, [#allocation9], 64, 64, 4
    $region9: #{tpu_custom_call.1} parent=1 // pred_fallthru
      _
    // Predicated region
    $region10: #{tpu_custom_call.1} parent=1 // pred_check
      _
    $region11: #{tpu_custom_call.1} parent=1 // pred_check_branch
      %41 = sbr.rel (0) target = $region13
    $region12: #{tpu_custom_call.1} parent=1 // pred_region
      _
    $region13: #{tpu_custom_call.1} parent=1 // pred_fallthru
      _
    // Predicated region
    $region14: #{tpu_custom_call.1} parent=1 // pred_check
      _
    $region15: #{tpu_custom_call.1} parent=1 // pred_check_branch
      %43 = sbr.rel (0) target = $region17
    $region16: #{tpu_custom_call.1} parent=1 // pred_region
      %45 = vsyncadd [#allocation9], 0
      %s46 = sshll.u32 %s3, 4
      %s47 = int_to_ptr.hbm [resolvable:$true] %s46
      %s48 = sshll.u32 [#allocation10], 4
      %s49 = int_to_ptr.vmem [resolvable:$true] %s48
      %54 = dma.hbm_to_vmem [thread:$0]  %s47, 256, %s49, [#allocation9], 64, 64, 4
    $region17: #{tpu_custom_call.1} parent=1 // pred_fallthru
      _
    // Predicated region
    $region18: #{tpu_custom_call.1} parent=1 // pred_check
      _
    $region19: #{tpu_custom_call.1} parent=1 // pred_check_branch
      %56 = sbr.rel (0) target = $region21
    $region20: #{tpu_custom_call.1} parent=1 // pred_region
      _
    $region21: #{tpu_custom_call.1} parent=1 // pred_fallthru
      _
    // Predicated region
    $region22: #{tpu_custom_call.1} parent=1 // pred_check
      _
    $region23: #{tpu_custom_call.1} parent=1 // pred_check_branch
      %58 = sbr.rel (0) target = $region25
    $region24: #{tpu_custom_call.1} parent=1 // pred_region
      %60 = dma.done [#allocation6], 16
    $region25: #{tpu_custom_call.1} parent=1 // pred_fallthru
      _
    // Predicated region
    $region26: #{tpu_custom_call.1} parent=1 // pred_check
      _
    $region27: #{tpu_custom_call.1} parent=1 // pred_check_branch
      %62 = sbr.rel (0) target = $region29
    $region28: #{tpu_custom_call.1} parent=1 // pred_region
      %64 = dma.done [#allocation9], 1024
    $region29: #{tpu_custom_call.1} parent=1 // pred_fallthru
      _
    // Predicated region
    $region30: #{tpu_custom_call.1} parent=1 // pred_check
      _
    $region31: #{tpu_custom_call.1} parent=1 // pred_check_branch
      %66 = sbr.rel (0) target = $region33
    $region32: #{tpu_custom_call.1} parent=1 // pred_region
      %68 = dma.done [#allocation9], 256
    $region33: #{tpu_custom_call.1} parent=1 // pred_fallthru
      _
    %p70 = scmp.eq.s32.totalorder 0, 0
    // Predicated region
    $region34: #{tpu_custom_call.1} parent=1 // pred_check
      %p71 = pneg %p70
    $region35: #{tpu_custom_call.1} parent=1 // pred_check_branch
      %73 = sbr.rel (%p71) target = $region37
    $region36: #{tpu_custom_call.1} parent=1 // pred_region
      %v74 = vld [vmem:[#allocation5] sm:$0x1]
      %v75 = vld [vmem:[#allocation8] sm:$0xf]
      %v76 = vld [vmem:[#allocation8 + $0x4] sm:$0xf]
      %v77 = vld [vmem:[#allocation8 + $0x8] sm:$0xf]
      %v78 = vld [vmem:[#allocation8 + $0xc] sm:$0xf]
      %v79 = vld [vmem:[#allocation8 + $0x10] sm:$0xf]
      %v80 = vld [vmem:[#allocation8 + $0x14] sm:$0xf]
      %v81 = vld [vmem:[#allocation8 + $0x18] sm:$0xf]
      %v82 = vld [vmem:[#allocation8 + $0x1c] sm:$0xf]
      %v83 = vld [vmem:[#allocation8 + $0x20] sm:$0xf]
      %v84 = vld [vmem:[#allocation8 + $0x24] sm:$0xf]
      %v85 = vld [vmem:[#allocation8 + $0x28] sm:$0xf]
      %v86 = vld [vmem:[#allocation8 + $0x2c] sm:$0xf]
      %v87 = vld [vmem:[#allocation8 + $0x30] sm:$0xf]
      %v88 = vld [vmem:[#allocation8 + $0x34] sm:$0xf]
      %v89 = vld [vmem:[#allocation8 + $0x38] sm:$0xf]
      %v90 = vld [vmem:[#allocation8 + $0x3c] sm:$0xf]
      %v91 = vld [vmem:[%s2] sm:$0x1]
      %v93 = vperm.slane %v91, 0
      %v111 = vunpack.c.l.b16 %v75
      %v112 = vunpack.c.l.b16 %v76
      %v113 = vunpack.c.l.b16 %v77
      %v114 = vunpack.c.l.b16 %v78
      %v115 = vunpack.c.l.b16 %v79
      %v116 = vunpack.c.l.b16 %v80
      %v117 = vunpack.c.l.b16 %v81
      %v118 = vunpack.c.l.b16 %v82
      %v119 = vunpack.c.l.b16 %v83
      %v120 = vunpack.c.l.b16 %v84
      %v121 = vunpack.c.l.b16 %v85
      %v122 = vunpack.c.l.b16 %v86
      %v123 = vunpack.c.l.b16 %v87
      %v124 = vunpack.c.l.b16 %v88
      %v125 = vunpack.c.l.b16 %v89
      %v126 = vunpack.c.l.b16 %v90
      %v127 = vpack.c.b16 %v112, %v111
      %v128 = vpack.c.b16 %v114, %v113
      %v129 = vpack.c.b16 %v116, %v115
      %v130 = vpack.c.b16 %v118, %v117
      %v131 = vpack.c.b16 %v120, %v119
      %v132 = vpack.c.b16 %v122, %v121
      %v133 = vpack.c.b16 %v124, %v123
      %v134 = vpack.c.b16 %v126, %v125
      %143 = vmatpush.bf16.msra.mxu0 %v134
      %144 = vmatpush.bf16.msra.mxu0 %v133
      %145 = vmatpush.bf16.msra.mxu0 %v132
      %146 = vmatpush.bf16.msra.mxu0 %v131
      %147 = vmatpush.bf16.msra.mxu0 %v130
      %148 = vmatpush.bf16.msra.mxu0 %v129
      %149 = vmatpush.bf16.msra.mxu0 %v128
      %150 = vmatpush.bf16.msra.mxu0 %v127
      %151 = vmatmul.bf16.gmra.mxu0 %v74
      %v152 = vpop.f32.mrf.mxu0
      %v153 = vadd.f32 %v93, %v152
      %v154 = vpop.f32.mrf.mxu0
      %155 = vdwg.mxu0
      %v156 = vtanh.pop %v153
      %157 = vst [vmem:[#allocation12] sm:$0x3] %v156
      %v158 = vpack.c.bf16 %v156, %v156
      %vm159 = vcmask 253952
      %160 = vst.msk [vmem:[#allocation2] sm:$0x1] %vm159, %v158
      %vm161 = vcmask 1024
      %162 = vst.msk [vmem:[#allocation3] sm:$0x3] %vm161, -inf
      %163 = vst.msk [vmem:[#allocation4] sm:$0x3] %vm161, 0.0
    $region37: #{tpu_custom_call.1} parent=1 // pred_fallthru
      _
    %v164 = vld [vmem:[#allocation2] sm:$0x1]
    %v165 = vld [vmem:[#allocation10] sm:$0xf]
    %v166 = vld [vmem:[#allocation10 + $0x4] sm:$0xf]
    %v167 = vld [vmem:[#allocation10 + $0x8] sm:$0xf]
    %v168 = vld [vmem:[#allocation10 + $0xc] sm:$0xf]
    %v169 = vld [vmem:[%s4] sm:$0x1]
    %v171 = vperm.slane %v169, 0
    %v177 = vunpack.c.l.b16 %v165
    %v178 = vunpack.c.l.b16 %v166
    %v179 = vunpack.c.l.b16 %v167
    %v180 = vunpack.c.l.b16 %v168
    %v181 = vpack.c.b16 %v178, %v177
    %v182 = vpack.c.b16 %v180, %v179
    %vm185 = vcmask 261120
    %v187 = vsel %vm185, %v164, 0
    %189 = vmatpush.bf16.msra.mxu0 0
    %190 = vmatpush.bf16.msra.mxu0 0
    %191 = vmatpush.bf16.msra.mxu0 0
    %192 = vmatpush.bf16.msra.mxu0 0
    %193 = vmatpush.bf16.msra.mxu0 0
    %194 = vmatpush.bf16.msra.mxu0 0
    %195 = vmatpush.bf16.msra.mxu0 %v182
    %196 = vmatpush.bf16.msra.mxu0 %v181
    %197 = vmatmul.bf16.gmra.mxu0 %v187
    %v198 = vpop.f32.mrf.mxu0
    %v199 = vadd.f32 %v171, %v198
    %v200 = vpop.f32.mrf.mxu0
    %201 = vdwg.mxu0
    %s202 = smul.u32 0, 128
    %s203 = sshra.s32 %s202, 7
    %s204 = sand.u32 %s202, 127
    %s205 = scalar_lea.vmem [#allocation11], %s203
    %206 = vst [vmem:[%s205] sm:$0x3] %v199
    %v207 = vld [vmem:[#allocation3] sm:$0x3]
    %vm208 = vcmask 1041408
    %v209 = vsel %vm208, %v199, -inf
    %210 = vmax.xlane.f32.xlu0 %v209
    %v211 = vpop.xlane.xlu0 %210
    %v212 = vmax.f32 %v207, %v211
    %v213 = vld [vmem:[#allocation4] sm:$0x3]
    %v214 = vsub.f32 %v207, %v212
    %v215 = vmul.f32 %v214, 1.442695
    %v216 = vpow.pop %v215
    %v217 = vmul.f32 %v213, %v216
    %219 = vset.pattern.permute.xlu0 0
    %220 = vperm.xlu0 %219, %v212
    %v221 = vpop.permute.xlu0 %220
    %v223 = vsub.f32 %v199, %v221
    %v224 = vmul.f32 %v223, 1.442695
    %v225 = vpow.pop %v224
    %v226 = vsel %vm208, %v225, 0.0
    %227 = vadd.xlane.f32.xlu0 %v226
    %v228 = vpop.xlane.xlu0 %227
    %v229 = vadd.f32 %v217, %v228
    %vm230 = vcmask 1024
    %231 = vst.msk [vmem:[#allocation4] sm:$0x3] %vm230, %v229
    %232 = vst.msk [vmem:[#allocation3] sm:$0x3] %vm230, %v212
    // Predicated region
    $region38: #{tpu_custom_call.1} parent=1 // pred_check
      %p233 = pneg %p70
    $region39: #{tpu_custom_call.1} parent=1 // pred_check_branch
      %235 = sbr.rel (%p233) target = $region41
    $region40: #{tpu_custom_call.1} parent=1 // pred_region
      %v236 = vld [vmem:[#allocation3] sm:$0x3]
      %v237 = vld [vmem:[#allocation4] sm:$0x3]
      %v238 = vlog2.pop %v237
      %v239 = vmul.f32 %v238, 0.6931472
      %v240 = vadd.f32 %v236, %v239
      %v241 = vld [vmem:[#allocation11] sm:$0x3]
      %243 = vset.pattern.permute.xlu0 0
      %244 = vperm.xlu0 %243, %v240
      %v245 = vpop.permute.xlu0 %244
      %v247 = vsub.f32 %v241, %v245
      %248 = vst [vmem:[#allocation11] sm:$0x3] %v247
    $region41: #{tpu_custom_call.1} parent=1 // pred_fallthru
      _
    // Predicated region
    $region42: #{tpu_custom_call.1} parent=1 // pred_check
      _
    $region43: #{tpu_custom_call.1} parent=1 // pred_check_branch
      %250 = sbr.rel (0) target = $region45
    $region44: #{tpu_custom_call.1} parent=1 // pred_region
      %252 = vsyncadd [#allocation7], 0
      %s254 = sshll.u32 [#allocation11], 4
      %s255 = int_to_ptr.vmem [resolvable:$true] %s254
      %s256 = sshll.u32 %s5, 4
      %s257 = int_to_ptr.hbm [resolvable:$true] %s256
      %259 = dma.vmem_to_hbm [thread:$0]  %s255, 32, %s257, [#allocation7]
    $region45: #{tpu_custom_call.1} parent=1 // pred_fallthru
      _
    // Predicated region
    $region46: #{tpu_custom_call.1} parent=1 // pred_check
      _
    $region47: #{tpu_custom_call.1} parent=1 // pred_check_branch
      %261 = sbr.rel (0) target = $region49
    $region48: #{tpu_custom_call.1} parent=1 // pred_region
      %263 = vsyncadd [#allocation13], 0
      %s265 = sshll.u32 [#allocation12], 4
      %s266 = int_to_ptr.vmem [resolvable:$true] %s265
      %s267 = sshll.u32 %s6, 4
      %s268 = int_to_ptr.hbm [resolvable:$true] %s267
      %270 = dma.vmem_to_hbm [thread:$0]  %s266, 32, %s268, [#allocation13]
    $region49: #{tpu_custom_call.1} parent=1 // pred_fallthru
      _
    // Predicated region
    $region50: #{tpu_custom_call.1} parent=1 // pred_check
      _
    $region51: #{tpu_custom_call.1} parent=1 // pred_check_branch
      %272 = sbr.rel (0) target = $region53
    $region52: #{tpu_custom_call.1} parent=1 // pred_region
      %274 = dma.done [#allocation7], 32
    $region53: #{tpu_custom_call.1} parent=1 // pred_fallthru
      _
    // Predicated region
    $region54: #{tpu_custom_call.1} parent=1 // pred_check
      _
    $region55: #{tpu_custom_call.1} parent=1 // pred_check_branch
      %276 = sbr.rel (0) target = $region57
    $region56: #{tpu_custom_call.1} parent=1 // pred_region
      %278 = dma.done [#allocation13], 32
    $region57: #{tpu_custom_call.1} parent=1 // pred_fallthru
      _
    %279 = vsyncpa [#allocation6], 1
    %280 = vsyncpa [#allocation9], 1
    %281 = vsyncpa [#allocation7], 1
    %282 = vsyncpa [#allocation13], 1

</llo_original>
